<compile_context>
chip_gen: v7x
topology: tpu7x:2x2x1
jax: 0.10.0
libtpu: 0.0.40
codegen_flags: <defaults>
</compile_context>

<pallas_src>
import math

import jax
import jax.numpy as jnp
from jax.experimental import pallas as pl
from jax.experimental.pallas import tpu as pltpu

MAX_PERIOD = 10000.0


def _round_up(x, m):
    return ((x + m - 1) // m) * m


def timestep_embedder_kernel(t_ref, freqs_ref, w_ref, b_ref, o_ref):
    """One batch-tile of the fused forward.

    t_ref     : (BN, 1)              f32  timesteps
    freqs_ref : (1, half_pad)        f32  frequency table (grid-invariant)
    w_ref     : (2*half_pad + H, H)  bf16 packed weights:
                  rows [0:half_pad)            = W1 rows multiplying cos
                  rows [half_pad:2*half_pad)   = W1 rows multiplying sin
                  rows [2*half_pad:)           = W2
    b_ref     : (2, H)               f32  row 0 = b1, row 1 = b2
    o_ref     : (BN, H)              f32  output tile
    """
    half_pad = freqs_ref.shape[1]
    d_eff = 2 * half_pad

    t = t_ref[...]                                   # (BN, 1)  f32
    args = t * freqs_ref[...]                        # (BN, half_pad) f32

    cos_e = jnp.cos(args).astype(jnp.bfloat16)       # (BN, half_pad)
    sin_e = jnp.sin(args).astype(jnp.bfloat16)       # (BN, half_pad)

    # ---- Linear 1 as two dots (no lane-axis concat), f32 accumulation ----
    h = jnp.dot(cos_e, w_ref[0:half_pad, :], preferred_element_type=jnp.float32)
    h = h + jnp.dot(sin_e, w_ref[half_pad:d_eff, :],
                    preferred_element_type=jnp.float32)
    h = h + b_ref[0:1, :]                            # (BN, H) f32

    # ---- SiLU (f32 on VPU/EUP) ----
    h = h * jax.nn.sigmoid(h)

    # ---- Linear 2 ----
    out = jnp.dot(h.astype(jnp.bfloat16), w_ref[d_eff:, :],
                  preferred_element_type=jnp.float32)
    out = out + b_ref[1:2, :]

    o_ref[...] = out.astype(o_ref.dtype)


def _batch_map(i):
    return (i, 0)


def _const_map(i):
    return (0, 0)


def timestep_embedder_forward(t, params, *, max_block_n=512):
    """Fused TimestepEmbedder forward.  t: (N,) -> (N, H) f32."""
    w = params["w"]            # (2*half_pad + H, H) bf16
    b = params["b"]            # (2, H)              f32
    freqs = params["freqs"]    # (1, half_pad)       f32
    H = w.shape[1]

    N = t.shape[0]
    # Big batch tile: single grid step for small N, multiple of 8 always.
    block_n = min(max_block_n, _round_up(N, 8))
    n_pad = _round_up(N, block_n)

    t2 = jnp.pad(t.astype(jnp.float32).reshape(N, 1), ((0, n_pad - N), (0, 0)))

    out = pl.pallas_call(
        timestep_embedder_kernel,
        out_shape=jax.ShapeDtypeStruct((n_pad, H), jnp.float32),
        grid=(n_pad // block_n,),
        in_specs=[
            # timesteps: one (block_n, 1) tile per grid step
            pl.BlockSpec((block_n, 1), _batch_map),
            # grid-invariant params: full-extent blocks, constant block index
            # -> fetched once, VMEM-resident across the whole batch loop.
            pl.BlockSpec(freqs.shape, _const_map),
            pl.BlockSpec(w.shape, _const_map),
            pl.BlockSpec(b.shape, _const_map),
        ],
        out_specs=pl.BlockSpec((block_n, H), _batch_map),
        compiler_params=pltpu.CompilerParams(
            dimension_semantics=("parallel",)),   # shards across v7x's 2 TCs
    )(t2, freqs, w, b)

    return out[:N]


def init_params(key, hidden_size, frequency_embedding_size=256):
    """Mirror nn.Linear default init; pack weights (bf16), biases + freqs (f32)."""
    k1, k2, k3, k4 = jax.random.split(key, 4)

    def linear(kw, kb, fan_in, fan_out):
        bound = 1.0 / math.sqrt(fan_in)
        w_ = jax.random.uniform(kw, (fan_in, fan_out), jnp.float32, -bound, bound)
        b_ = jax.random.uniform(kb, (fan_out,), jnp.float32, -bound, bound)
        return w_, b_

    w1, b1 = linear(k1, k2, frequency_embedding_size, hidden_size)
    w2, b2 = linear(k3, k4, hidden_size, hidden_size)

    half = frequency_embedding_size // 2
    # Odd frequency_embedding_size: the last embedding column is a zero pad,
    # so dropping its weight row (row 2*half of w1) is exactly equivalent.
    w1_cos = w1[:half]               # rows multiplying cos(args)
    w1_sin = w1[half:2 * half]       # rows multiplying sin(args)

    # Pad each half to a multiple of 16 rows (bf16 sublane packing) so the
    # in-kernel slab splits land on packed-tile boundaries.  Padded weight
    # rows are zero, padded freq entries are zero -> contribution is exactly 0.
    half_pad = _round_up(max(half, 1), 16)
    pad = half_pad - half
    if pad:
        w1_cos = jnp.pad(w1_cos, ((0, pad), (0, 0)))
        w1_sin = jnp.pad(w1_sin, ((0, pad), (0, 0)))

    freqs = jnp.exp(-math.log(MAX_PERIOD)
                    * jnp.arange(half, dtype=jnp.float32) / half)
    freqs = jnp.pad(freqs, (0, pad)).reshape(1, half_pad)

    w_packed = jnp.concatenate([w1_cos, w1_sin, w2], axis=0).astype(jnp.bfloat16)
    b_packed = jnp.stack([b1, b2], axis=0)  # (2, H) f32

    return dict(w=w_packed, b=b_packed, freqs=freqs)


def timestep_embedder_reference(t, params):
    """Pure-JAX f32 reference (same bf16-rounded weights, f32 math)."""
    w = params["w"].astype(jnp.float32)
    b = params["b"]
    freqs = params["freqs"]                      # (1, half_pad)
    half_pad = freqs.shape[1]
    d_eff = 2 * half_pad
    args = t[:, None].astype(jnp.float32) * freqs
    emb = jnp.concatenate([jnp.cos(args), jnp.sin(args)], axis=-1)
    h = emb @ w[:d_eff] + b[0]
    h = h * jax.nn.sigmoid(h)
    return h @ w[d_eff:] + b[1]


if __name__ == "__main__":
    N = 10                 # batch of timesteps (deliberately not a multiple of 8)
    HIDDEN = 128           # hidden_size
    FREQ = 256             # frequency_embedding_size (module default)

    key = jax.random.PRNGKey(0)
    kt, kp = jax.random.split(key)
    t = jax.random.uniform(kt, (N,), jnp.float32, 0.0, 1000.0)
    params = init_params(kp, HIDDEN, FREQ)

    out = timestep_embedder_forward(t, params)
    out = jax.block_until_ready(out)

    ref = timestep_embedder_reference(t, params)
    assert out.shape == (N, HIDDEN)
    max_err = float(jnp.max(jnp.abs(out - ref)))
    # bf16 activations/weights on the MXU (f32 accumulate) -> relaxed tolerance.
    assert jnp.allclose(out, ref, atol=2e-2, rtol=2e-2), (
        f"mismatch vs reference, max abs err = {max_err}")

    print("KERNEL_OK")
</pallas_src>

<mosaic_0001>
module attributes {stable_mosaic.version = 11 : i64} {
  func.func @timestep_embedder_kernel(%arg0: i32, %arg1: memref<16x1xf32, #tpu.memory_space<vmem>>, %arg2: memref<1x128xf32, #tpu.memory_space<vmem>>, %arg3: memref<384x128xbf16, #tpu.memory_space<vmem>>, %arg4: memref<2x128xf32, #tpu.memory_space<vmem>>, %arg5: memref<16x128xf32, #tpu.memory_space<vmem>>) attributes {dimension_semantics = [#tpu.dimension_semantics<parallel>], iteration_bounds = array<i64: 1>, scalar_prefetch = 0 : i64, scratch_operands = 0 : i64, tpu.core_type = #tpu.core_type<tc>, window_params = [{transform_indices = @transform_0, window_bounds = array<i64: 16, 1>}, {pipeline_mode = #tpu.pipeline_mode<synchronous>, transform_indices = @transform_1, window_bounds = array<i64: 1, 128>}, {pipeline_mode = #tpu.pipeline_mode<synchronous>, transform_indices = @transform_2, window_bounds = array<i64: 384, 128>}, {pipeline_mode = #tpu.pipeline_mode<synchronous>, transform_indices = @transform_3, window_bounds = array<i64: 2, 128>}, {transform_indices = @transform_4, window_bounds = array<i64: 16, 128>}]} {
    %c0 = arith.constant 0 : index
    %c0_0 = arith.constant 0 : index
    %0 = vector.load %arg1[%c0, %c0_0] : memref<16x1xf32, #tpu.memory_space<vmem>>, vector<16x1xf32>
    %c0_1 = arith.constant 0 : index
    %c0_2 = arith.constant 0 : index
    %1 = vector.load %arg2[%c0_1, %c0_2] : memref<1x128xf32, #tpu.memory_space<vmem>>, vector<1x128xf32>
    %2 = vector.broadcast %0 : vector<16x1xf32> to vector<16x128xf32>
    %3 = vector.broadcast %1 : vector<1x128xf32> to vector<16x128xf32>
    %4 = arith.mulf %2, %3 : vector<16x128xf32>
    %5 = math.cos %4 : vector<16x128xf32>
    %6 = arith.truncf %5 : vector<16x128xf32> to vector<16x128xbf16>
    %7 = math.sin %4 : vector<16x128xf32>
    %8 = arith.truncf %7 : vector<16x128xf32> to vector<16x128xbf16>
    %c0_3 = arith.constant 0 : index
    %c0_4 = arith.constant 0 : index
    %9 = vector.load %arg3[%c0_3, %c0_4] : memref<384x128xbf16, #tpu.memory_space<vmem>>, vector<128x128xbf16>
    %cst = arith.constant dense<0.000000e+00> : vector<16x128xf32>
    %10 = tpu.matmul %6, %9, %cst {dimension_numbers = #tpu.dot_dimension_numbers<[1], [0], [0], [1], [0, 0, 1, 1], [], []>} : vector<16x128xbf16>, vector<128x128xbf16>, vector<16x128xf32> -> vector<16x128xf32>
    %c128 = arith.constant 128 : index
    %c0_5 = arith.constant 0 : index
    %11 = vector.load %arg3[%c128, %c0_5] : memref<384x128xbf16, #tpu.memory_space<vmem>>, vector<128x128xbf16>
    %cst_6 = arith.constant dense<0.000000e+00> : vector<16x128xf32>
    %12 = tpu.matmul %8, %11, %cst_6 {dimension_numbers = #tpu.dot_dimension_numbers<[1], [0], [0], [1], [0, 0, 1, 1], [], []>} : vector<16x128xbf16>, vector<128x128xbf16>, vector<16x128xf32> -> vector<16x128xf32>
    %13 = arith.addf %10, %12 : vector<16x128xf32>
    %c0_7 = arith.constant 0 : index
    %c0_8 = arith.constant 0 : index
    %14 = vector.load %arg4[%c0_7, %c0_8] : memref<2x128xf32, #tpu.memory_space<vmem>>, vector<1x128xf32>
    %15 = vector.broadcast %14 : vector<1x128xf32> to vector<16x128xf32>
    %16 = arith.addf %13, %15 : vector<16x128xf32>
    %17 = arith.negf %16 : vector<16x128xf32>
    %18 = math.exp %17 : vector<16x128xf32>
    %cst_9 = arith.constant 1.000000e+00 : f32
    %19 = vector.broadcast %cst_9 : f32 to vector<16x128xf32>
    %20 = arith.addf %19, %18 : vector<16x128xf32>
    %21 = arith.divf %19, %20 : vector<16x128xf32>
    %22 = arith.mulf %16, %21 : vector<16x128xf32>
    %23 = arith.truncf %22 : vector<16x128xf32> to vector<16x128xbf16>
    %c256 = arith.constant 256 : index
    %c0_10 = arith.constant 0 : index
    %24 = vector.load %arg3[%c256, %c0_10] : memref<384x128xbf16, #tpu.memory_space<vmem>>, vector<128x128xbf16>
    %cst_11 = arith.constant dense<0.000000e+00> : vector<16x128xf32>
    %25 = tpu.matmul %23, %24, %cst_11 {dimension_numbers = #tpu.dot_dimension_numbers<[1], [0], [0], [1], [0, 0, 1, 1], [], []>} : vector<16x128xbf16>, vector<128x128xbf16>, vector<16x128xf32> -> vector<16x128xf32>
    %c1 = arith.constant 1 : index
    %c0_12 = arith.constant 0 : index
    %26 = vector.load %arg4[%c1, %c0_12] : memref<2x128xf32, #tpu.memory_space<vmem>>, vector<1x128xf32>
    %27 = vector.broadcast %26 : vector<1x128xf32> to vector<16x128xf32>
    %28 = arith.addf %25, %27 : vector<16x128xf32>
    %c0_13 = arith.constant 0 : index
    %c0_14 = arith.constant 0 : index
    %29 = vector.load %arg5[%c0_13, %c0_14] : memref<16x128xf32, #tpu.memory_space<vmem>>, vector<16x128xf32>
    tpu.vector_store %arg5[%c0_13, %c0_14], %28 {strides = array<i32>} : memref<16x128xf32, #tpu.memory_space<vmem>>, vector<16x128xf32>,
    return
  }
  func.func @transform_0(%arg0: i32) -> (i32, i32) {
    %c0_i32 = arith.constant 0 : i32
    %c0_i32_0 = arith.constant 0 : i32
    return %arg0, %c0_i32 : i32, i32
  }
  func.func @transform_1(%arg0: i32) -> (i32, i32) {
    %c0_i32 = arith.constant 0 : i32
    %c0_i32_0 = arith.constant 0 : i32
    %c0_i32_1 = arith.constant 0 : i32
    return %c0_i32, %c0_i32_0 : i32, i32
  }
  func.func @transform_2(%arg0: i32) -> (i32, i32) {
    %c0_i32 = arith.constant 0 : i32
    %c0_i32_0 = arith.constant 0 : i32
    %c0_i32_1 = arith.constant 0 : i32
    return %c0_i32, %c0_i32_0 : i32, i32
  }
  func.func @transform_3(%arg0: i32) -> (i32, i32) {
    %c0_i32 = arith.constant 0 : i32
    %c0_i32_0 = arith.constant 0 : i32
    %c0_i32_1 = arith.constant 0 : i32
    return %c0_i32, %c0_i32_0 : i32, i32
  }
  func.func @transform_4(%arg0: i32) -> (i32, i32) {
    %c0_i32 = arith.constant 0 : i32
    %c0_i32_0 = arith.constant 0 : i32
    return %arg0, %c0_i32 : i32, i32
  }
}

</mosaic_0001>

<llo_original>
// kernel: tpu_custom_call.1
$region0: #{tpu_custom_call.1}
  #allocation0 [shape = 'u32[]', space=smem, size = 0x4, offset = 0x4, fixed_abs, tag = 'smem constant byte address 0x4 - core index']
  #allocation1 [shape = 'u32[144,128]{1,0:T(1,128)}', space=vmem, size = 0x12000, scoped, tag = 'internal scratch']
  %s0 = inlined_call_operand.vmem [shape: f32[16,1], index: 0, kind: input, shape index: {}]
  %s1 = inlined_call_operand.vmem [shape: f32[1,128], index: 1, kind: input, shape index: {}]
  %s2 = inlined_call_operand.hbm [shape: bf16[384,128], index: 2, kind: input, shape index: {}]
  %s3 = inlined_call_operand.vmem [shape: f32[2,128], index: 3, kind: input, shape index: {}]
  %s4 = inlined_call_operand.hbm [shape: f32[16,128], index: 4, kind: output, shape index: {}]
  %s5 = sld [smem:[#allocation0]]
  $region30: #{tpu_custom_call.1} parent=0
    _
  %s7 = ssub.s32 1, %s5
  %s8 = scalar_select 0, %s7, %s5
  $region1: #{tpu_custom_call.1} parent=0
    #allocation2 [shape = 'u8[98304]{0}', space=vmem, size = 0x18000, scoped, tag = 'input window, operand 2, single buffered']
    #allocation3 [shape = 's32[1]{0}', space=sflag, size = 0x4, scoped, tag = 'scoped memory for tpu_custom_call.1']
    #allocation4 [shape = 's32[1]{0}', space=sflag, size = 0x4, scoped, tag = 'scoped memory for tpu_custom_call.1']
    #allocation5 [shape = 'u8[8192]{0}', space=vmem, size = 0x2000, scoped, tag = 'output window, operand 0, single buffered']
    %9 = vsyncpa [#allocation3], 0
    %10 = vsyncpa [#allocation4], 0
    // Predicated region
    $region2: #{tpu_custom_call.1} parent=1 // pred_check
      _
    $region3: #{tpu_custom_call.1} parent=1 // pred_check_branch
      %12 = sbr.rel (0) target = $region5
    $region4: #{tpu_custom_call.1} parent=1 // pred_region
      _
    $region5: #{tpu_custom_call.1} parent=1 // pred_fallthru
      _
    // Predicated region
    $region6: #{tpu_custom_call.1} parent=1 // pred_check
      _
    $region7: #{tpu_custom_call.1} parent=1 // pred_check_branch
      %14 = sbr.rel (0) target = $region9
    $region8: #{tpu_custom_call.1} parent=1 // pred_region
      _
    $region9: #{tpu_custom_call.1} parent=1 // pred_fallthru
      _
    // Predicated region
    $region10: #{tpu_custom_call.1} parent=1 // pred_check
      _
    $region11: #{tpu_custom_call.1} parent=1 // pred_check_branch
      %16 = sbr.rel (0) target = $region13
    $region12: #{tpu_custom_call.1} parent=1 // pred_region
      %s18 = ssub.s32 3072, 3072
      %19 = vsyncadd [#allocation3], %s18
      %s20 = sshll.u32 [#allocation2], 4
      %s21 = int_to_ptr.vmem [resolvable:$true] %s20
      %26 = dma.hbm_to_vmem [thread:$0]  %s2, 3072, %s21, [#allocation3], 64, 64, 4
    $region13: #{tpu_custom_call.1} parent=1 // pred_fallthru
      _
    // Predicated region
    $region14: #{tpu_custom_call.1} parent=1 // pred_check
      _
    $region15: #{tpu_custom_call.1} parent=1 // pred_check_branch
      %28 = sbr.rel (0) target = $region17
    $region16: #{tpu_custom_call.1} parent=1 // pred_region
      _
    $region17: #{tpu_custom_call.1} parent=1 // pred_fallthru
      _
    // Predicated region
    $region18: #{tpu_custom_call.1} parent=1 // pred_check
      _
    $region19: #{tpu_custom_call.1} parent=1 // pred_check_branch
      %30 = sbr.rel (0) target = $region21
    $region20: #{tpu_custom_call.1} parent=1 // pred_region
      %31 = dma.done [#allocation3], 3072
    $region21: #{tpu_custom_call.1} parent=1 // pred_fallthru
      _
    %v33 = vld [vmem:[%s0] sm:$0xff]
    %v34 = vld [vmem:[%s0 + $0x8] sm:$0xff]
    %v35 = vld [vmem:[%s1] sm:$0x1]
    %37 = vset.pattern.permute.xlu0 0
    %38 = vperm.xlu0 %37, %v33
    %v39 = vpop.permute.xlu0 %38
    %42 = vset.pattern.permute.xlu0 0
    %43 = vperm.xlu0 %42, %v34
    %v44 = vpop.permute.xlu0 %43
    %v47 = vlaneseq
    %v48 = vshrl.u32 %v47, 7
    %v49 = vsub.s32 0, %v48
    %v50 = vrot.slane %v35, %v49
    %v52 = vmul.f32 %v39, %v50
    %v53 = vmul.f32 %v44, %v50
    %v54 = vand.u32 2147483647, %v52
    %vm55 = vcmp.le.f32.partialorder %v54, 0.7853982
    %vm56 = vcmp.lt.s32.totalorder %v52, 0
    %v57 = vand.u32 %v52, 2139095040
    %v58 = vshrl.u32 %v57, 23
    %v59 = vsub.s32 %v58, 127
    %v60 = vand.u32 2147483647, %v52
    %v61 = vand.u32 %v60, 8388607
    %v62 = vor.u32 %v61, 8388608
    %v63 = vsub.s32 0, %v62
    %v64 = vadd.s32 %v59, 1
    %vm65 = vcmp.gt.s32.totalorder %v64, 0
    %v66 = vsel %vm65, %v64, 0
    %v67 = vshrl.u32 %v66, 5
    %v68 = vand.u32 %v66, 31
    %v69 = vsub.s32 32, %v68
    %v70 = vshrl.u32 683565275, %v69
    %v71 = vshll.u32 683565275, %v68
    %v72 = vshrl.u32 2475754826, %v69
    %v73 = vor.u32 %v71, %v72
    %v74 = vshll.u32 2475754826, %v68
    %v75 = vshrl.u32 2131351028, %v69
    %v76 = vor.u32 %v74, %v75
    %v77 = vshll.u32 2131351028, %v68
    %v78 = vshrl.u32 2102212464, %v69
    %v79 = vor.u32 %v77, %v78
    %v80 = vshll.u32 2102212464, %v68
    %v81 = vshrl.u32 920167782, %v69
    %v82 = vor.u32 %v80, %v81
    %v83 = vshll.u32 920167782, %v68
    %v84 = vshrl.u32 1326507024, %v69
    %v85 = vor.u32 %v83, %v84
    %vm86 = vcmp.lt.s32.totalorder %v67, 1
    %vm87 = vcmp.lt.s32.totalorder %v67, 2
    %vm88 = vcmp.lt.s32.totalorder %v67, 3
    %vm89 = vcmp.lt.s32.totalorder %v67, 4
    %v90 = vsel %vm86, %v70, %v73
    %v91 = vsel %vm89, %v79, 2102212464
    %v92 = vsel %vm88, %v76, %v91
    %v93 = vsel %vm87, %v90, %v92
    %v94 = vsel %vm86, %v73, %v76
    %v95 = vsel %vm89, %v82, 920167782
    %v96 = vsel %vm88, %v79, %v95
    %v97 = vsel %vm87, %v94, %v96
    %v98 = vsel %vm86, %v76, %v79
    %v99 = vsel %vm89, %v85, 1326507024
    %v100 = vsel %vm88, %v82, %v99
    %v101 = vsel %vm87, %v98, %v100
    %v102 = vshll.u32 %v62, 8
    %v103 = vmul.u32.u64.compose %v102, %v101
    %v104 = vextract.low.u32 %v103
    %v105 = vextract.high.u32 %v103
    %v106 = vmul.u32.u64.compose %v102, %v97
    %v107 = vextract.low.u32 %v106
    %v108 = vextract.high.u32 %v106
    %v109 = vmul.u32 %v102, %v93
    %v110 = vadd.s32 %v105, %v107
    %vm111 = vc.u32 %v105, %v107
    %v112 = vadd.s32 %v108, 1
    %v113 = vsel %vm111, %v112, %v108
    %v114 = vadd.s32 %v109, %v113
    %v115 = vadd.s32 %v114, 536870912
    %v116 = vshrl.u32 %v115, 30
    %v117 = vshll.u32 %v116, 30
    %v118 = vsub.s32 %v114, %v117
    %vm119 = vcmp.lt.s32.totalorder %v118, 0
    %v120 = vsub.s32 0, %v118
    %v121 = vsel %vm119, %v120, %v118
    %v122 = vclz %v121
    %v123 = vsub.s32 %v122, 2
    %vm124 = vcmp.gt.s32.totalorder 0, %v123
    %v125 = vsel %vm124, 0, %v123
    %v126 = vsub.s32 32, %v125
    %v127 = vshll.u32 %v118, %v125
    %v128 = vshrl.u32 %v110, %v126
    %v129 = vor.u32 %v127, %v128
    %v130 = vsub.s32 4294967266, %v125
    %v131 = vadd.s32 %v130, 127
    %v132 = vshll.u32 %v131, 23
    %v133 = vor.u32 4788187, %v132
    %v134 = vand.u32 2147483647, %v133
    %v136 = vcvt.s32.f32 %v129
    %v137 = vmul.f32 %v136, %v134
    %v138 = vxor.u32 %v137, 2147483648
    %v139 = vsel %vm56, %v138, %v137
    %v140 = vsub.s32 4, %v116
    %v141 = vsel %vm56, %v140, %v116
    %v142 = vsel %vm55, %v52, %v139
    %v143 = vsel %vm55, 0, %v141
    %v144 = vcosq.f32.pop %v142
    %v145 = vsinq.f32.pop %v142
    %vm146 = vweird.f32 %v52
    %v147 = vand.u32 %v143, 3
    %vm148 = vcmp.lt.s32.totalorder %v147, 2
    %vm149 = vcmp.eq.s32.totalorder %v147, 0
    %v150 = vxor.u32 %v145, 2147483648
    %v151 = vsel %vm149, %v144, %v150
    %vm152 = vcmp.eq.s32.totalorder %v147, 2
    %v153 = vxor.u32 %v144, 2147483648
    %v154 = vsel %vm152, %v153, %v145
    %v155 = vsel %vm148, %v151, %v154
    %v156 = vsel %vm146, nan, %v155
    %v157 = vand.u32 2147483647, %v53
    %vm158 = vcmp.le.f32.partialorder %v157, 0.7853982
    %vm159 = vcmp.lt.s32.totalorder %v53, 0
    %v160 = vand.u32 %v53, 2139095040
    %v161 = vshrl.u32 %v160, 23
    %v162 = vsub.s32 %v161, 127
    %v163 = vand.u32 2147483647, %v53
    %v164 = vand.u32 %v163, 8388607
    %v165 = vor.u32 %v164, 8388608
    %v166 = vsub.s32 0, %v165
    %v167 = vadd.s32 %v162, 1
    %vm168 = vcmp.gt.s32.totalorder %v167, 0
    %v169 = vsel %vm168, %v167, 0
    %v170 = vshrl.u32 %v169, 5
    %v171 = vand.u32 %v169, 31
    %v172 = vsub.s32 32, %v171
    %v173 = vshrl.u32 683565275, %v172
    %v174 = vshll.u32 683565275, %v171
    %v175 = vshrl.u32 2475754826, %v172
    %v176 = vor.u32 %v174, %v175
    %v177 = vshll.u32 2475754826, %v171
    %v178 = vshrl.u32 2131351028, %v172
    %v179 = vor.u32 %v177, %v178
    %v180 = vshll.u32 2131351028, %v171
    %v181 = vshrl.u32 2102212464, %v172
    %v182 = vor.u32 %v180, %v181
    %v183 = vshll.u32 2102212464, %v171
    %v184 = vshrl.u32 920167782, %v172
    %v185 = vor.u32 %v183, %v184
    %v186 = vshll.u32 920167782, %v171
    %v187 = vshrl.u32 1326507024, %v172
    %v188 = vor.u32 %v186, %v187
    %vm189 = vcmp.lt.s32.totalorder %v170, 1
    %vm190 = vcmp.lt.s32.totalorder %v170, 2
    %vm191 = vcmp.lt.s32.totalorder %v170, 3
    %vm192 = vcmp.lt.s32.totalorder %v170, 4
    %v193 = vsel %vm189, %v173, %v176
    %v194 = vsel %vm192, %v182, 2102212464
    %v195 = vsel %vm191, %v179, %v194
    %v196 = vsel %vm190, %v193, %v195
    %v197 = vsel %vm189, %v176, %v179
    %v198 = vsel %vm192, %v185, 920167782
    %v199 = vsel %vm191, %v182, %v198
    %v200 = vsel %vm190, %v197, %v199
    %v201 = vsel %vm189, %v179, %v182
    %v202 = vsel %vm192, %v188, 1326507024
    %v203 = vsel %vm191, %v185, %v202
    %v204 = vsel %vm190, %v201, %v203
    %v205 = vshll.u32 %v165, 8
    %v206 = vmul.u32.u64.compose %v205, %v204
    %v207 = vextract.low.u32 %v206
    %v208 = vextract.high.u32 %v206
    %v209 = vmul.u32.u64.compose %v205, %v200
    %v210 = vextract.low.u32 %v209
    %v211 = vextract.high.u32 %v209
    %v212 = vmul.u32 %v205, %v196
    %v213 = vadd.s32 %v208, %v210
    %vm214 = vc.u32 %v208, %v210
    %v215 = vadd.s32 %v211, 1
    %v216 = vsel %vm214, %v215, %v211
    %v217 = vadd.s32 %v212, %v216
    %v218 = vadd.s32 %v217, 536870912
    %v219 = vshrl.u32 %v218, 30
    %v220 = vshll.u32 %v219, 30
    %v221 = vsub.s32 %v217, %v220
    %vm222 = vcmp.lt.s32.totalorder %v221, 0
    %v223 = vsub.s32 0, %v221
    %v224 = vsel %vm222, %v223, %v221
    %v225 = vclz %v224
    %v226 = vsub.s32 %v225, 2
    %vm227 = vcmp.gt.s32.totalorder 0, %v226
    %v228 = vsel %vm227, 0, %v226
    %v229 = vsub.s32 32, %v228
    %v230 = vshll.u32 %v221, %v228
    %v231 = vshrl.u32 %v213, %v229
    %v232 = vor.u32 %v230, %v231
    %v233 = vsub.s32 4294967266, %v228
    %v234 = vadd.s32 %v233, 127
    %v235 = vshll.u32 %v234, 23
    %v236 = vor.u32 4788187, %v235
    %v237 = vand.u32 2147483647, %v236
    %v239 = vcvt.s32.f32 %v232
    %v240 = vmul.f32 %v239, %v237
    %v241 = vxor.u32 %v240, 2147483648
    %v242 = vsel %vm159, %v241, %v240
    %v243 = vsub.s32 4, %v219
    %v244 = vsel %vm159, %v243, %v219
    %v245 = vsel %vm158, %v53, %v242
    %v246 = vsel %vm158, 0, %v244
    %v247 = vcosq.f32.pop %v245
    %v248 = vsinq.f32.pop %v245
    %vm249 = vweird.f32 %v53
    %v250 = vand.u32 %v246, 3
    %vm251 = vcmp.lt.s32.totalorder %v250, 2
    %vm252 = vcmp.eq.s32.totalorder %v250, 0
    %v253 = vxor.u32 %v248, 2147483648
    %v254 = vsel %vm252, %v247, %v253
    %vm255 = vcmp.eq.s32.totalorder %v250, 2
    %v256 = vxor.u32 %v247, 2147483648
    %v257 = vsel %vm255, %v256, %v248
    %v258 = vsel %vm251, %v254, %v257
    %v259 = vsel %vm249, nan, %v258
    %v260 = vpack.c.bf16 %v259, %v156
    %v261 = vand.u32 2147483647, %v52
    %vm262 = vcmp.le.f32.partialorder %v261, 0.7853982
    %vm263 = vcmp.lt.s32.totalorder %v52, 0
    %v264 = vand.u32 %v52, 2139095040
    %v265 = vshrl.u32 %v264, 23
    %v266 = vsub.s32 %v265, 127
    %v267 = vand.u32 2147483647, %v52
    %v268 = vand.u32 %v267, 8388607
    %v269 = vor.u32 %v268, 8388608
    %v270 = vsub.s32 0, %v269
    %v271 = vadd.s32 %v266, 1
    %vm272 = vcmp.gt.s32.totalorder %v271, 0
    %v273 = vsel %vm272, %v271, 0
    %v274 = vshrl.u32 %v273, 5
    %v275 = vand.u32 %v273, 31
    %v276 = vsub.s32 32, %v275
    %v277 = vshrl.u32 683565275, %v276
    %v278 = vshll.u32 683565275, %v275
    %v279 = vshrl.u32 2475754826, %v276
    %v280 = vor.u32 %v278, %v279
    %v281 = vshll.u32 2475754826, %v275
    %v282 = vshrl.u32 2131351028, %v276
    %v283 = vor.u32 %v281, %v282
    %v284 = vshll.u32 2131351028, %v275
    %v285 = vshrl.u32 2102212464, %v276
    %v286 = vor.u32 %v284, %v285
    %v287 = vshll.u32 2102212464, %v275
    %v288 = vshrl.u32 920167782, %v276
    %v289 = vor.u32 %v287, %v288
    %v290 = vshll.u32 920167782, %v275
    %v291 = vshrl.u32 1326507024, %v276
    %v292 = vor.u32 %v290, %v291
    %vm293 = vcmp.lt.s32.totalorder %v274, 1
    %vm294 = vcmp.lt.s32.totalorder %v274, 2
    %vm295 = vcmp.lt.s32.totalorder %v274, 3
    %vm296 = vcmp.lt.s32.totalorder %v274, 4
    %v297 = vsel %vm293, %v277, %v280
    %v298 = vsel %vm296, %v286, 2102212464
    %v299 = vsel %vm295, %v283, %v298
    %v300 = vsel %vm294, %v297, %v299
    %v301 = vsel %vm293, %v280, %v283
    %v302 = vsel %vm296, %v289, 920167782
    %v303 = vsel %vm295, %v286, %v302
    %v304 = vsel %vm294, %v301, %v303
    %v305 = vsel %vm293, %v283, %v286
    %v306 = vsel %vm296, %v292, 1326507024
    %v307 = vsel %vm295, %v289, %v306
    %v308 = vsel %vm294, %v305, %v307
    %v309 = vshll.u32 %v269, 8
    %v310 = vmul.u32.u64.compose %v309, %v308
    %v311 = vextract.low.u32 %v310
    %v312 = vextract.high.u32 %v310
    %v313 = vmul.u32.u64.compose %v309, %v304
    %v314 = vextract.low.u32 %v313
    %v315 = vextract.high.u32 %v313
    %v316 = vmul.u32 %v309, %v300
    %v317 = vadd.s32 %v312, %v314
    %vm318 = vc.u32 %v312, %v314
    %v319 = vadd.s32 %v315, 1
    %v320 = vsel %vm318, %v319, %v315
    %v321 = vadd.s32 %v316, %v320
    %v322 = vadd.s32 %v321, 536870912
    %v323 = vshrl.u32 %v322, 30
    %v324 = vshll.u32 %v323, 30
    %v325 = vsub.s32 %v321, %v324
    %vm326 = vcmp.lt.s32.totalorder %v325, 0
    %v327 = vsub.s32 0, %v325
    %v328 = vsel %vm326, %v327, %v325
    %v329 = vclz %v328
    %v330 = vsub.s32 %v329, 2
    %vm331 = vcmp.gt.s32.totalorder 0, %v330
    %v332 = vsel %vm331, 0, %v330
    %v333 = vsub.s32 32, %v332
    %v334 = vshll.u32 %v325, %v332
    %v335 = vshrl.u32 %v317, %v333
    %v336 = vor.u32 %v334, %v335
    %v337 = vsub.s32 4294967266, %v332
    %v338 = vadd.s32 %v337, 127
    %v339 = vshll.u32 %v338, 23
    %v340 = vor.u32 4788187, %v339
    %v341 = vand.u32 2147483647, %v340
    %v343 = vcvt.s32.f32 %v336
    %v344 = vmul.f32 %v343, %v341
    %v345 = vxor.u32 %v344, 2147483648
    %v346 = vsel %vm263, %v345, %v344
    %v347 = vsub.s32 4, %v323
    %v348 = vsel %vm263, %v347, %v323
    %v349 = vsel %vm262, %v52, %v346
    %v350 = vsel %vm262, 0, %v348
    %v351 = vcosq.f32.pop %v349
    %v352 = vsinq.f32.pop %v349
    %vm353 = vweird.f32 %v52
    %v354 = vadd.s32 %v350, 3
    %v355 = vand.u32 %v354, 3
    %vm356 = vcmp.lt.s32.totalorder %v355, 2
    %vm357 = vcmp.eq.s32.totalorder %v355, 0
    %v358 = vxor.u32 %v352, 2147483648
    %v359 = vsel %vm357, %v351, %v358
    %vm360 = vcmp.eq.s32.totalorder %v355, 2
    %v361 = vxor.u32 %v351, 2147483648
    %v362 = vsel %vm360, %v361, %v352
    %v363 = vsel %vm356, %v359, %v362
    %v364 = vsel %vm353, nan, %v363
    %v365 = vand.u32 2147483647, %v53
    %vm366 = vcmp.le.f32.partialorder %v365, 0.7853982
    %vm367 = vcmp.lt.s32.totalorder %v53, 0
    %v368 = vand.u32 %v53, 2139095040
    %v369 = vshrl.u32 %v368, 23
    %v370 = vsub.s32 %v369, 127
    %v371 = vand.u32 2147483647, %v53
    %v372 = vand.u32 %v371, 8388607
    %v373 = vor.u32 %v372, 8388608
    %v374 = vsub.s32 0, %v373
    %v375 = vadd.s32 %v370, 1
    %vm376 = vcmp.gt.s32.totalorder %v375, 0
    %v377 = vsel %vm376, %v375, 0
    %v378 = vshrl.u32 %v377, 5
    %v379 = vand.u32 %v377, 31
    %v380 = vsub.s32 32, %v379
    %v381 = vshrl.u32 683565275, %v380
    %v382 = vshll.u32 683565275, %v379
    %v383 = vshrl.u32 2475754826, %v380
    %v384 = vor.u32 %v382, %v383
    %v385 = vshll.u32 2475754826, %v379
    %v386 = vshrl.u32 2131351028, %v380
    %v387 = vor.u32 %v385, %v386
    %v388 = vshll.u32 2131351028, %v379
    %v389 = vshrl.u32 2102212464, %v380
    %v390 = vor.u32 %v388, %v389
    %v391 = vshll.u32 2102212464, %v379
    %v392 = vshrl.u32 920167782, %v380
    %v393 = vor.u32 %v391, %v392
    %v394 = vshll.u32 920167782, %v379
    %v395 = vshrl.u32 1326507024, %v380
    %v396 = vor.u32 %v394, %v395
    %vm397 = vcmp.lt.s32.totalorder %v378, 1
    %vm398 = vcmp.lt.s32.totalorder %v378, 2
    %vm399 = vcmp.lt.s32.totalorder %v378, 3
    %vm400 = vcmp.lt.s32.totalorder %v378, 4
    %v401 = vsel %vm397, %v381, %v384
    %v402 = vsel %vm400, %v390, 2102212464
    %v403 = vsel %vm399, %v387, %v402
    %v404 = vsel %vm398, %v401, %v403
    %v405 = vsel %vm397, %v384, %v387
    %v406 = vsel %vm400, %v393, 920167782
    %v407 = vsel %vm399, %v390, %v406
    %v408 = vsel %vm398, %v405, %v407
    %v409 = vsel %vm397, %v387, %v390
    %v410 = vsel %vm400, %v396, 1326507024
    %v411 = vsel %vm399, %v393, %v410
    %v412 = vsel %vm398, %v409, %v411
    %v413 = vshll.u32 %v373, 8
    %v414 = vmul.u32.u64.compose %v413, %v412
    %v415 = vextract.low.u32 %v414
    %v416 = vextract.high.u32 %v414
    %v417 = vmul.u32.u64.compose %v413, %v408
    %v418 = vextract.low.u32 %v417
    %v419 = vextract.high.u32 %v417
    %v420 = vmul.u32 %v413, %v404
    %v421 = vadd.s32 %v416, %v418
    %vm422 = vc.u32 %v416, %v418
    %v423 = vadd.s32 %v419, 1
    %v424 = vsel %vm422, %v423, %v419
    %v425 = vadd.s32 %v420, %v424
    %v426 = vadd.s32 %v425, 536870912
    %v427 = vshrl.u32 %v426, 30
    %v428 = vshll.u32 %v427, 30
    %v429 = vsub.s32 %v425, %v428
    %vm430 = vcmp.lt.s32.totalorder %v429, 0
    %v431 = vsub.s32 0, %v429
    %v432 = vsel %vm430, %v431, %v429
    %v433 = vclz %v432
    %v434 = vsub.s32 %v433, 2
    %vm435 = vcmp.gt.s32.totalorder 0, %v434
    %v436 = vsel %vm435, 0, %v434
    %v437 = vsub.s32 32, %v436
    %v438 = vshll.u32 %v429, %v436
    %v439 = vshrl.u32 %v421, %v437
    %v440 = vor.u32 %v438, %v439
    %v441 = vsub.s32 4294967266, %v436
    %v442 = vadd.s32 %v441, 127
    %v443 = vshll.u32 %v442, 23
    %v444 = vor.u32 4788187, %v443
    %v445 = vand.u32 2147483647, %v444
    %v447 = vcvt.s32.f32 %v440
    %v448 = vmul.f32 %v447, %v445
    %v449 = vxor.u32 %v448, 2147483648
    %v450 = vsel %vm367, %v449, %v448
    %v451 = vsub.s32 4, %v427
    %v452 = vsel %vm367, %v451, %v427
    %v453 = vsel %vm366, %v53, %v450
    %v454 = vsel %vm366, 0, %v452
    %v455 = vcosq.f32.pop %v453
    %v456 = vsinq.f32.pop %v453
    %vm457 = vweird.f32 %v53
    %v458 = vadd.s32 %v454, 3
    %v459 = vand.u32 %v458, 3
    %vm460 = vcmp.lt.s32.totalorder %v459, 2
    %vm461 = vcmp.eq.s32.totalorder %v459, 0
    %v462 = vxor.u32 %v456, 2147483648
    %v463 = vsel %vm461, %v455, %v462
    %vm464 = vcmp.eq.s32.totalorder %v459, 2
    %v465 = vxor.u32 %v455, 2147483648
    %v466 = vsel %vm464, %v465, %v456
    %v467 = vsel %vm460, %v463, %v466
    %v468 = vsel %vm457, nan, %v467
    %v469 = vpack.c.bf16 %v468, %v364
    %v470 = vld [vmem:[#allocation2] sm:$0xf]
    %v471 = vld [vmem:[#allocation2 + $0x4] sm:$0xf]
    %v472 = vld [vmem:[#allocation2 + $0x8] sm:$0xf]
    %v473 = vld [vmem:[#allocation2 + $0xc] sm:$0xf]
    %v474 = vld [vmem:[#allocation2 + $0x10] sm:$0xf]
    %v475 = vld [vmem:[#allocation2 + $0x14] sm:$0xf]
    %v476 = vld [vmem:[#allocation2 + $0x18] sm:$0xf]
    %v477 = vld [vmem:[#allocation2 + $0x1c] sm:$0xf]
    %v478 = vld [vmem:[#allocation2 + $0x20] sm:$0xf]
    %v479 = vld [vmem:[#allocation2 + $0x24] sm:$0xf]
    %v480 = vld [vmem:[#allocation2 + $0x28] sm:$0xf]
    %v481 = vld [vmem:[#allocation2 + $0x2c] sm:$0xf]
    %v482 = vld [vmem:[#allocation2 + $0x30] sm:$0xf]
    %v483 = vld [vmem:[#allocation2 + $0x34] sm:$0xf]
    %v484 = vld [vmem:[#allocation2 + $0x38] sm:$0xf]
    %v485 = vld [vmem:[#allocation2 + $0x3c] sm:$0xf]
    %v486 = vld [vmem:[#allocation2 + $0x40] sm:$0xf]
    %v487 = vld [vmem:[#allocation2 + $0x44] sm:$0xf]
    %v488 = vld [vmem:[#allocation2 + $0x48] sm:$0xf]
    %v489 = vld [vmem:[#allocation2 + $0x4c] sm:$0xf]
    %v490 = vld [vmem:[#allocation2 + $0x50] sm:$0xf]
    %v491 = vld [vmem:[#allocation2 + $0x54] sm:$0xf]
    %v492 = vld [vmem:[#allocation2 + $0x58] sm:$0xf]
    %v493 = vld [vmem:[#allocation2 + $0x5c] sm:$0xf]
    %v494 = vld [vmem:[#allocation2 + $0x60] sm:$0xf]
    %v495 = vld [vmem:[#allocation2 + $0x64] sm:$0xf]
    %v496 = vld [vmem:[#allocation2 + $0x68] sm:$0xf]
    %v497 = vld [vmem:[#allocation2 + $0x6c] sm:$0xf]
    %v498 = vld [vmem:[#allocation2 + $0x70] sm:$0xf]
    %v499 = vld [vmem:[#allocation2 + $0x74] sm:$0xf]
    %v500 = vld [vmem:[#allocation2 + $0x78] sm:$0xf]
    %v501 = vld [vmem:[#allocation2 + $0x7c] sm:$0xf]
    %v518 = vunpack.c.l.b16 %v486
    %v519 = vunpack.c.l.b16 %v487
    %v520 = vunpack.c.l.b16 %v488
    %v521 = vunpack.c.l.b16 %v489
    %v522 = vunpack.c.l.b16 %v490
    %v523 = vunpack.c.l.b16 %v491
    %v524 = vunpack.c.l.b16 %v492
    %v525 = vunpack.c.l.b16 %v493
    %v526 = vunpack.c.l.b16 %v494
    %v527 = vunpack.c.l.b16 %v495
    %v528 = vunpack.c.l.b16 %v496
    %v529 = vunpack.c.l.b16 %v497
    %v530 = vunpack.c.l.b16 %v498
    %v531 = vunpack.c.l.b16 %v499
    %v532 = vunpack.c.l.b16 %v500
    %v533 = vunpack.c.l.b16 %v501
    %v534 = vpack.c.b16 %v519, %v518
    %v535 = vpack.c.b16 %v521, %v520
    %v536 = vpack.c.b16 %v523, %v522
    %v537 = vpack.c.b16 %v525, %v524
    %v538 = vpack.c.b16 %v527, %v526
    %v539 = vpack.c.b16 %v529, %v528
    %v540 = vpack.c.b16 %v531, %v530
    %v541 = vpack.c.b16 %v533, %v532
    %550 = vmatprep.subr.bf16.mxu0 0
    %551 = vmatpush1.bf16.msra.mxu0 %v534
    %552 = vmatprep.subr.bf16.mxu0 0
    %553 = vmatpush1.bf16.msra.mxu0 %v535
    %554 = vmatprep.subr.bf16.mxu0 0
    %555 = vmatpush1.bf16.msra.mxu0 %v536
    %556 = vmatprep.subr.bf16.mxu0 0
    %557 = vmatpush1.bf16.msra.mxu0 %v537
    %558 = vmatprep.subr.bf16.mxu0 0
    %559 = vmatpush1.bf16.msra.mxu0 %v538
    %560 = vmatprep.subr.bf16.mxu0 0
    %561 = vmatpush1.bf16.msra.mxu0 %v539
    %562 = vmatprep.subr.bf16.mxu0 0
    %563 = vmatpush1.bf16.msra.mxu0 %v540
    %564 = vmatprep.subr.bf16.mxu0 0
    %565 = vmatpush1.bf16.msra.mxu0 %v541
    %566 = vmatprep.subr.bf16.mxu0 0
    %567 = vmatpush1.bf16.msra.mxu0 0
    %568 = vmatprep.subr.bf16.mxu0 0
    %569 = vmatpush1.bf16.msra.mxu0 0
    %570 = vmatprep.subr.bf16.mxu0 0
    %571 = vmatpush1.bf16.msra.mxu0 0
    %572 = vmatprep.subr.bf16.mxu0 0
    %573 = vmatpush1.bf16.msra.mxu0 0
    %574 = vmatprep.subr.bf16.mxu0 0
    %575 = vmatpush1.bf16.msra.mxu0 0
    %576 = vmatprep.subr.bf16.mxu0 0
    %577 = vmatpush1.bf16.msra.mxu0 0
    %578 = vmatprep.subr.bf16.mxu0 0
    %579 = vmatpush1.bf16.msra.mxu0 0
    %580 = vmatprep.subr.bf16.mxu0 0
    %581 = vmatpush1.bf16.msra.mxu0 0
    %582 = vmatprep.mubr.bf16.mxu0 0
    %583 = vmatmul.mubr.bf16.gmra.mrb[0].mxu0 %v469
    %v584 = vpop.f32.mrb[0].mxu0
    %v585 = vadd.f32 0.0, %v584
    %v586 = vpop.f32.mrb[0].mxu0
    %v587 = vpop.f32.mrb[0].mxu0
    %v588 = vadd.f32 0.0, %v587
    %v589 = vpop.f32.mrb[0].mxu0
    %590 = vdwg.mxu0
    %v607 = vunpack.c.l.b16 %v470
    %v608 = vunpack.c.l.b16 %v471
    %v609 = vunpack.c.l.b16 %v472
    %v610 = vunpack.c.l.b16 %v473
    %v611 = vunpack.c.l.b16 %v474
    %v612 = vunpack.c.l.b16 %v475
    %v613 = vunpack.c.l.b16 %v476
    %v614 = vunpack.c.l.b16 %v477
    %v615 = vunpack.c.l.b16 %v478
    %v616 = vunpack.c.l.b16 %v479
    %v617 = vunpack.c.l.b16 %v480
    %v618 = vunpack.c.l.b16 %v481
    %v619 = vunpack.c.l.b16 %v482
    %v620 = vunpack.c.l.b16 %v483
    %v621 = vunpack.c.l.b16 %v484
    %v622 = vunpack.c.l.b16 %v485
    %v623 = vpack.c.b16 %v608, %v607
    %v624 = vpack.c.b16 %v610, %v609
    %v625 = vpack.c.b16 %v612, %v611
    %v626 = vpack.c.b16 %v614, %v613
    %v627 = vpack.c.b16 %v616, %v615
    %v628 = vpack.c.b16 %v618, %v617
    %v629 = vpack.c.b16 %v620, %v619
    %v630 = vpack.c.b16 %v622, %v621
    %639 = vmatprep.subr.bf16.mxu0 0
    %640 = vmatpush1.bf16.msra.mxu0 %v623
    %641 = vmatprep.subr.bf16.mxu0 0
    %642 = vmatpush1.bf16.msra.mxu0 %v624
    %643 = vmatprep.subr.bf16.mxu0 0
    %644 = vmatpush1.bf16.msra.mxu0 %v625
    %645 = vmatprep.subr.bf16.mxu0 0
    %646 = vmatpush1.bf16.msra.mxu0 %v626
    %647 = vmatprep.subr.bf16.mxu0 0
    %648 = vmatpush1.bf16.msra.mxu0 %v627
    %649 = vmatprep.subr.bf16.mxu0 0
    %650 = vmatpush1.bf16.msra.mxu0 %v628
    %651 = vmatprep.subr.bf16.mxu0 0
    %652 = vmatpush1.bf16.msra.mxu0 %v629
    %653 = vmatprep.subr.bf16.mxu0 0
    %654 = vmatpush1.bf16.msra.mxu0 %v630
    %655 = vmatprep.subr.bf16.mxu0 0
    %656 = vmatpush1.bf16.msra.mxu0 0
    %657 = vmatprep.subr.bf16.mxu0 0
    %658 = vmatpush1.bf16.msra.mxu0 0
    %659 = vmatprep.subr.bf16.mxu0 0
    %660 = vmatpush1.bf16.msra.mxu0 0
    %661 = vmatprep.subr.bf16.mxu0 0
    %662 = vmatpush1.bf16.msra.mxu0 0
    %663 = vmatprep.subr.bf16.mxu0 0
    %664 = vmatpush1.bf16.msra.mxu0 0
    %665 = vmatprep.subr.bf16.mxu0 0
    %666 = vmatpush1.bf16.msra.mxu0 0
    %667 = vmatprep.subr.bf16.mxu0 0
    %668 = vmatpush1.bf16.msra.mxu0 0
    %669 = vmatprep.subr.bf16.mxu0 0
    %670 = vmatpush1.bf16.msra.mxu0 0
    %671 = vmatprep.mubr.bf16.mxu0 0
    %672 = vmatmul.mubr.bf16.gmra.mrb[0].mxu0 %v260
    %v673 = vpop.f32.mrb[0].mxu0
    %v674 = vadd.f32 %v585, %v673
    %v675 = vpop.f32.mrb[0].mxu0
    %v676 = vpop.f32.mrb[0].mxu0
    %v677 = vadd.f32 %v588, %v676
    %v678 = vpop.f32.mrb[0].mxu0
    %679 = vdwg.mxu0
    %v680 = vld [vmem:[%s3] sm:$0x1]
    %v681 = vlaneseq
    %v682 = vshrl.u32 %v681, 7
    %v683 = vsub.s32 0, %v682
    %v684 = vrot.slane %v680, %v683
    %v685 = vadd.f32 %v674, %v684
    %v686 = vadd.f32 %v677, %v684
    %v687 = vxor.u32 %v685, 2147483648
    %v688 = vxor.u32 %v686, 2147483648
    %v689 = vmul.f32 %v687, 1.442695
    %v690 = vpow.pop %v689
    %v691 = vmul.f32 %v688, 1.442695
    %v692 = vpow.pop %v691
    %v693 = vadd.f32 %v690, 1.0
    %v694 = vadd.f32 %v692, 1.0
    %v695 = vrcp.pop %v693
    %v696 = vmul.f32 1.0, %v695
    %v697 = vrcp.pop %v694
    %v698 = vmul.f32 1.0, %v697
    %v699 = vmul.f32 %v685, %v696
    %v700 = vmul.f32 %v686, %v698
    %v701 = vpack.c.bf16 %v700, %v699
    %v702 = vld [vmem:[#allocation2 + $0x80] sm:$0xf]
    %v703 = vld [vmem:[#allocation2 + $0x84] sm:$0xf]
    %v704 = vld [vmem:[#allocation2 + $0x88] sm:$0xf]
    %v705 = vld [vmem:[#allocation2 + $0x8c] sm:$0xf]
    %v706 = vld [vmem:[#allocation2 + $0x90] sm:$0xf]
    %v707 = vld [vmem:[#allocation2 + $0x94] sm:$0xf]
    %v708 = vld [vmem:[#allocation2 + $0x98] sm:$0xf]
    %v709 = vld [vmem:[#allocation2 + $0x9c] sm:$0xf]
    %v710 = vld [vmem:[#allocation2 + $0xa0] sm:$0xf]
    %v711 = vld [vmem:[#allocation2 + $0xa4] sm:$0xf]
    %v712 = vld [vmem:[#allocation2 + $0xa8] sm:$0xf]
    %v713 = vld [vmem:[#allocation2 + $0xac] sm:$0xf]
    %v714 = vld [vmem:[#allocation2 + $0xb0] sm:$0xf]
    %v715 = vld [vmem:[#allocation2 + $0xb4] sm:$0xf]
    %v716 = vld [vmem:[#allocation2 + $0xb8] sm:$0xf]
    %v717 = vld [vmem:[#allocation2 + $0xbc] sm:$0xf]
    %v718 = vld [vmem:[%s3 + $0x1] sm:$0x1]
    %v719 = vlaneseq
    %v720 = vshrl.u32 %v719, 7
    %v721 = vsub.s32 0, %v720
    %v722 = vrot.slane %v718, %v721
    %v739 = vunpack.c.l.b16 %v702
    %v740 = vunpack.c.l.b16 %v703
    %v741 = vunpack.c.l.b16 %v704
    %v742 = vunpack.c.l.b16 %v705
    %v743 = vunpack.c.l.b16 %v706
    %v744 = vunpack.c.l.b16 %v707
    %v745 = vunpack.c.l.b16 %v708
    %v746 = vunpack.c.l.b16 %v709
    %v747 = vunpack.c.l.b16 %v710
    %v748 = vunpack.c.l.b16 %v711
    %v749 = vunpack.c.l.b16 %v712
    %v750 = vunpack.c.l.b16 %v713
    %v751 = vunpack.c.l.b16 %v714
    %v752 = vunpack.c.l.b16 %v715
    %v753 = vunpack.c.l.b16 %v716
    %v754 = vunpack.c.l.b16 %v717
    %v755 = vpack.c.b16 %v740, %v739
    %v756 = vpack.c.b16 %v742, %v741
    %v757 = vpack.c.b16 %v744, %v743
    %v758 = vpack.c.b16 %v746, %v745
    %v759 = vpack.c.b16 %v748, %v747
    %v760 = vpack.c.b16 %v750, %v749
    %v761 = vpack.c.b16 %v752, %v751
    %v762 = vpack.c.b16 %v754, %v753
    %771 = vmatprep.subr.bf16.mxu0 0
    %772 = vmatpush1.bf16.msra.mxu0 %v755
    %773 = vmatprep.subr.bf16.mxu0 0
    %774 = vmatpush1.bf16.msra.mxu0 %v756
    %775 = vmatprep.subr.bf16.mxu0 0
    %776 = vmatpush1.bf16.msra.mxu0 %v757
    %777 = vmatprep.subr.bf16.mxu0 0
    %778 = vmatpush1.bf16.msra.mxu0 %v758
    %779 = vmatprep.subr.bf16.mxu0 0
    %780 = vmatpush1.bf16.msra.mxu0 %v759
    %781 = vmatprep.subr.bf16.mxu0 0
    %782 = vmatpush1.bf16.msra.mxu0 %v760
    %783 = vmatprep.subr.bf16.mxu0 0
    %784 = vmatpush1.bf16.msra.mxu0 %v761
    %785 = vmatprep.subr.bf16.mxu0 0
    %786 = vmatpush1.bf16.msra.mxu0 %v762
    %787 = vmatprep.subr.bf16.mxu0 0
    %788 = vmatpush1.bf16.msra.mxu0 0
    %789 = vmatprep.subr.bf16.mxu0 0
    %790 = vmatpush1.bf16.msra.mxu0 0
    %791 = vmatprep.subr.bf16.mxu0 0
    %792 = vmatpush1.bf16.msra.mxu0 0
    %793 = vmatprep.subr.bf16.mxu0 0
    %794 = vmatpush1.bf16.msra.mxu0 0
    %795 = vmatprep.subr.bf16.mxu0 0
    %796 = vmatpush1.bf16.msra.mxu0 0
    %797 = vmatprep.subr.bf16.mxu0 0
    %798 = vmatpush1.bf16.msra.mxu0 0
    %799 = vmatprep.subr.bf16.mxu0 0
    %800 = vmatpush1.bf16.msra.mxu0 0
    %801 = vmatprep.subr.bf16.mxu0 0
    %802 = vmatpush1.bf16.msra.mxu0 0
    %803 = vmatprep.mubr.bf16.mxu0 0
    %804 = vmatmul.mubr.bf16.gmra.mrb[0].mxu0 %v701
    %v805 = vpop.f32.mrb[0].mxu0
    %v806 = vadd.f32 %v722, %v805
    %v807 = vpop.f32.mrb[0].mxu0
    %v808 = vpop.f32.mrb[0].mxu0
    %v809 = vadd.f32 %v722, %v808
    %v810 = vpop.f32.mrb[0].mxu0
    %811 = vdwg.mxu0
    %812 = vst [vmem:[#allocation5] sm:$0xff] %v806
    %813 = vst [vmem:[#allocation5 + $0x8] sm:$0xff] %v809
    // Predicated region
    $region22: #{tpu_custom_call.1} parent=1 // pred_check
      _
    $region23: #{tpu_custom_call.1} parent=1 // pred_check_branch
      %815 = sbr.rel (0) target = $region25
    $region24: #{tpu_custom_call.1} parent=1 // pred_region
      %s817 = ssub.s32 256, 256
      %818 = vsyncadd [#allocation4], %s817
      %s819 = sshll.u32 [#allocation5], 4
      %s820 = int_to_ptr.vmem [resolvable:$true] %s819
      %825 = dma.vmem_to_hbm [thread:$0]  %s820, 256, %s4, [#allocation4], 128, 128, 8
    $region25: #{tpu_custom_call.1} parent=1 // pred_fallthru
      _
    // Predicated region
    $region26: #{tpu_custom_call.1} parent=1 // pred_check
      _
    $region27: #{tpu_custom_call.1} parent=1 // pred_check_branch
      %827 = sbr.rel (0) target = $region29
    $region28: #{tpu_custom_call.1} parent=1 // pred_region
      %828 = dma.done [#allocation4], 256
    $region29: #{tpu_custom_call.1} parent=1 // pred_fallthru
      _
    %829 = vsyncpa [#allocation3], 1
    %830 = vsyncpa [#allocation4], 1

</llo_original>
